<compile_context>
chip_gen: v7x
topology: tpu7x:2x2x1
jax: 0.10.0
libtpu: 0.0.40
codegen_flags: <defaults>
</compile_context>

<pallas_src>
import functools

import jax
import jax.numpy as jnp
from jax.experimental import pallas as pl
from jax.experimental.pallas import tpu as pltpu

H_NEURONS = 64
H_NEURONS2 = 16

_LANE = 128          # TPU vreg lane width
_SUB = 16            # bf16 sublane pack
_TB_MAX = 256        # max batch tile (MXU M dimension)


def _round_up(n, m):
    return (n + m - 1) // m * m


def _pad2(a, rows, cols, dtype=None):
    """Zero-pad a 2-D array up to (rows, cols), optionally casting."""
    r, c = a.shape
    a = jnp.pad(a, ((0, rows - r), (0, cols - c)))
    return a.astype(dtype) if dtype is not None else a


def _is_multi_tc():
    """Best-effort detection of a multi-TensorCore chip (v7x)."""
    try:
        kind = jax.devices()[0].device_kind.lower()
    except Exception:
        return False
    return "v7" in kind or "7x" in kind


def _pick_tb(batch):
    """Adaptive batch tile: no row padding for small batches; split tiles on v7x."""
    if batch <= _TB_MAX:
        return max(_SUB, _round_up(batch, _SUB))
    return 128 if _is_multi_tc() else _TB_MAX


# ---------------------------------------------------------------------------
# Kernel
# ---------------------------------------------------------------------------
def _net_kernel(x_ref, w1_ref, b1_ref, w2_ref, b2_ref, w3_ref, b3_ref, o_ref):
    # Layer 1: cast x to bf16 in-kernel; bf16 x bf16 -> f32 accumulate.
    x = x_ref[...].astype(jnp.bfloat16)
    h1 = jnp.dot(x, w1_ref[...], preferred_element_type=jnp.float32)
    h1 = jnp.maximum(h1 + b1_ref[...], 0.0)
    # Layer 2.
    h2 = jnp.dot(h1.astype(jnp.bfloat16), w2_ref[...],
                 preferred_element_type=jnp.float32)
    h2 = jnp.maximum(h2 + b2_ref[...], 0.0)
    # Output layer (true width OUT; write bytes stay minimal).
    out = jnp.dot(h2.astype(jnp.bfloat16), w3_ref[...],
                  preferred_element_type=jnp.float32)
    o_ref[...] = (out + b3_ref[...]).astype(o_ref.dtype)


# ---------------------------------------------------------------------------
# Parameter preparation (hoisted out of the per-call hot path)
# ---------------------------------------------------------------------------
def prepare_params(params):
    """Pad/cast weights once; reuse across many forward calls."""
    w1, b1 = params["w1"], params["b1"]
    w2, b2 = params["w2"], params["b2"]
    w3, b3 = params["w3"], params["b3"]
    S, H1 = w1.shape
    H2 = w2.shape[1]
    OUT = w3.shape[1]
    H1p = _round_up(H1, _LANE)     # only the wide hidden dim is lane-padded
    return {
        "w1": _pad2(w1, S, H1p, jnp.bfloat16),    # (S,   H1p) bf16
        "b1": _pad2(b1, 1, H1p),                  # (1,   H1p) f32
        "w2": _pad2(w2, H1p, H2, jnp.bfloat16),   # (H1p, H2 ) bf16
        "b2": b2.astype(jnp.float32),             # (1,   H2 ) f32
        "w3": w3.astype(jnp.bfloat16),            # (H2,  OUT) bf16
        "b3": b3.astype(jnp.float32),             # (1,   OUT) f32
    }


# ---------------------------------------------------------------------------
# Forward
# ---------------------------------------------------------------------------
@functools.partial(jax.jit, static_argnames=("tb",))
def _net_forward_jit(x, pparams, tb):
    w1, b1 = pparams["w1"], pparams["b1"]
    w2, b2 = pparams["w2"], pparams["b2"]
    w3, b3 = pparams["w3"], pparams["b3"]

    B, S = x.shape
    H1p = w1.shape[1]
    H2 = w2.shape[1]
    OUT = w3.shape[1]

    Bp = _round_up(B, tb)
    xp = x if Bp == B else jnp.pad(x, ((0, Bp - B), (0, 0)))

    resident = lambda shape: pl.BlockSpec(shape, lambda i: (0, 0))

    out = pl.pallas_call(
        _net_kernel,
        out_shape=jax.ShapeDtypeStruct((Bp, OUT), jnp.float32),
        grid=(Bp // tb,),
        in_specs=[
            pl.BlockSpec((tb, S), lambda i: (i, 0)),   # x tiles stream over batch
            resident((S, H1p)), resident((1, H1p)),    # weights/biases stay resident
            resident((H1p, H2)), resident((1, H2)),
            resident((H2, OUT)), resident((1, OUT)),
        ],
        out_specs=pl.BlockSpec((tb, OUT), lambda i: (i, 0)),
        compiler_params=pltpu.CompilerParams(
            dimension_semantics=("parallel",)),
    )(xp, w1, b1, w2, b2, w3, b3)

    return out if Bp == B else out[:B]


def net_forward(x, pparams):
    """x: (B, state_size) f32.  pparams: output of prepare_params()."""
    return _net_forward_jit(x, pparams, _pick_tb(x.shape[0]))


# ---------------------------------------------------------------------------
# Init + references
# ---------------------------------------------------------------------------
def init_params(key, state_size, action_len, action_size):
    out_size = action_len * action_size
    k1, k2, k3, k4, k5, k6 = jax.random.split(key, 6)
    # fc1.weight / out.weight ~ N(0, 0.1) (per the PyTorch module); others uniform.
    lim1 = 1.0 / jnp.sqrt(state_size)
    w1 = 0.1 * jax.random.normal(k1, (state_size, H_NEURONS), jnp.float32)
    b1 = jax.random.uniform(k2, (1, H_NEURONS), jnp.float32, -lim1, lim1)
    lim2 = 1.0 / jnp.sqrt(H_NEURONS)
    w2 = jax.random.uniform(k3, (H_NEURONS, H_NEURONS2), jnp.float32, -lim2, lim2)
    b2 = jax.random.uniform(k4, (1, H_NEURONS2), jnp.float32, -lim2, lim2)
    lim3 = 1.0 / jnp.sqrt(H_NEURONS2)
    w3 = 0.1 * jax.random.normal(k5, (H_NEURONS2, out_size), jnp.float32)
    b3 = jax.random.uniform(k6, (1, out_size), jnp.float32, -lim3, lim3)
    return {"w1": w1, "b1": b1, "w2": w2, "b2": b2, "w3": w3, "b3": b3}


def net_forward_ref_bf16(x, p):
    """Reference matching the kernel numerics (bf16 operands, f32 accumulate)."""
    bf = jnp.bfloat16
    h1 = jnp.maximum(
        jnp.dot(x.astype(bf), p["w1"].astype(bf),
                preferred_element_type=jnp.float32) + p["b1"], 0.0)
    h2 = jnp.maximum(
        jnp.dot(h1.astype(bf), p["w2"].astype(bf),
                preferred_element_type=jnp.float32) + p["b2"], 0.0)
    return jnp.dot(h2.astype(bf), p["w3"].astype(bf),
                   preferred_element_type=jnp.float32) + p["b3"]


def net_forward_ref_f32(x, p):
    h1 = jnp.maximum(x @ p["w1"] + p["b1"], 0.0)
    h2 = jnp.maximum(h1 @ p["w2"] + p["b2"], 0.0)
    return h2 @ p["w3"] + p["b3"]


if __name__ == "__main__":
    key = jax.random.PRNGKey(0)
    state_size, action_len, action_size = 8, 4, 2
    out_size = action_len * action_size

    kx1, kx2, kx3, kp = jax.random.split(key, 4)
    params = init_params(kp, state_size, action_len, action_size)
    pparams = prepare_params(params)   # pad/cast once, reused across forwards

    ok = True
    # Single-step action-selection batch, a replay minibatch, and a
    # non-multiple-of-tile batch (exercises multi-tile grid + row padding).
    for kx, batch in ((kx1, 8), (kx2, 256), (kx3, 384)):
        x = jax.random.normal(kx, (batch, state_size), jnp.float32)
        out = jax.block_until_ready(net_forward(x, pparams))

        assert out.shape == (batch, out_size)
        ref_bf = net_forward_ref_bf16(x, params)
        ref_f32 = net_forward_ref_f32(x, params)
        ok &= bool(jnp.allclose(out, ref_bf, atol=1e-2, rtol=1e-2))
        ok &= bool(jnp.allclose(out, ref_f32, atol=5e-2, rtol=5e-2))

    assert ok
    print("KERNEL_OK")
</pallas_src>

<mosaic_0001>
module attributes {stable_mosaic.version = 11 : i64} {
  func.func @_net_kernel(%arg0: i32, %arg1: memref<16x8xf32, #tpu.memory_space<vmem>>, %arg2: memref<8x128xbf16, #tpu.memory_space<vmem>>, %arg3: memref<1x128xf32, #tpu.memory_space<vmem>>, %arg4: memref<128x16xbf16, #tpu.memory_space<vmem>>, %arg5: memref<1x16xf32, #tpu.memory_space<vmem>>, %arg6: memref<16x8xbf16, #tpu.memory_space<vmem>>, %arg7: memref<1x8xf32, #tpu.memory_space<vmem>>, %arg8: memref<16x8xf32, #tpu.memory_space<vmem>>) attributes {dimension_semantics = [#tpu.dimension_semantics<parallel>], iteration_bounds = array<i64: 1>, scalar_prefetch = 0 : i64, scratch_operands = 0 : i64, tpu.core_type = #tpu.core_type<tc>, window_params = [{transform_indices = @transform_0, window_bounds = array<i64: 16, 8>}, {pipeline_mode = #tpu.pipeline_mode<synchronous>, transform_indices = @transform_1, window_bounds = array<i64: 8, 128>}, {pipeline_mode = #tpu.pipeline_mode<synchronous>, transform_indices = @transform_2, window_bounds = array<i64: 1, 128>}, {pipeline_mode = #tpu.pipeline_mode<synchronous>, transform_indices = @transform_3, window_bounds = array<i64: 128, 16>}, {pipeline_mode = #tpu.pipeline_mode<synchronous>, transform_indices = @transform_4, window_bounds = array<i64: 1, 16>}, {pipeline_mode = #tpu.pipeline_mode<synchronous>, transform_indices = @transform_5, window_bounds = array<i64: 16, 8>}, {pipeline_mode = #tpu.pipeline_mode<synchronous>, transform_indices = @transform_6, window_bounds = array<i64: 1, 8>}, {transform_indices = @transform_7, window_bounds = array<i64: 16, 8>}]} {
    %c0 = arith.constant 0 : index
    %c0_0 = arith.constant 0 : index
    %0 = vector.load %arg1[%c0, %c0_0] : memref<16x8xf32, #tpu.memory_space<vmem>>, vector<16x8xf32>
    %1 = arith.truncf %0 : vector<16x8xf32> to vector<16x8xbf16>
    %c0_1 = arith.constant 0 : index
    %c0_2 = arith.constant 0 : index
    %2 = vector.load %arg2[%c0_1, %c0_2] : memref<8x128xbf16, #tpu.memory_space<vmem>>, vector<8x128xbf16>
    %cst = arith.constant dense<0.000000e+00> : vector<16x128xf32>
    %3 = tpu.matmul %1, %2, %cst {dimension_numbers = #tpu.dot_dimension_numbers<[1], [0], [0], [1], [0, 0, 1, 1], [], []>} : vector<16x8xbf16>, vector<8x128xbf16>, vector<16x128xf32> -> vector<16x128xf32>
    %c0_3 = arith.constant 0 : index
    %c0_4 = arith.constant 0 : index
    %4 = vector.load %arg3[%c0_3, %c0_4] : memref<1x128xf32, #tpu.memory_space<vmem>>, vector<1x128xf32>
    %5 = vector.broadcast %4 : vector<1x128xf32> to vector<16x128xf32>
    %6 = arith.addf %3, %5 : vector<16x128xf32>
    %cst_5 = arith.constant 0.000000e+00 : f32
    %7 = vector.broadcast %cst_5 : f32 to vector<16x128xf32>
    %8 = arith.maximumf %6, %7 : vector<16x128xf32>
    %9 = arith.truncf %8 : vector<16x128xf32> to vector<16x128xbf16>
    %c0_6 = arith.constant 0 : index
    %c0_7 = arith.constant 0 : index
    %10 = vector.load %arg4[%c0_6, %c0_7] : memref<128x16xbf16, #tpu.memory_space<vmem>>, vector<128x16xbf16>
    %cst_8 = arith.constant dense<0.000000e+00> : vector<16x16xf32>
    %11 = tpu.matmul %9, %10, %cst_8 {dimension_numbers = #tpu.dot_dimension_numbers<[1], [0], [0], [1], [0, 0, 1, 1], [], []>} : vector<16x128xbf16>, vector<128x16xbf16>, vector<16x16xf32> -> vector<16x16xf32>
    %c0_9 = arith.constant 0 : index
    %c0_10 = arith.constant 0 : index
    %12 = vector.load %arg5[%c0_9, %c0_10] : memref<1x16xf32, #tpu.memory_space<vmem>>, vector<1x16xf32>
    %13 = vector.broadcast %12 : vector<1x16xf32> to vector<16x16xf32>
    %14 = arith.addf %11, %13 : vector<16x16xf32>
    %cst_11 = arith.constant 0.000000e+00 : f32
    %15 = vector.broadcast %cst_11 : f32 to vector<16x16xf32>
    %16 = arith.maximumf %14, %15 : vector<16x16xf32>
    %17 = arith.truncf %16 : vector<16x16xf32> to vector<16x16xbf16>
    %c0_12 = arith.constant 0 : index
    %c0_13 = arith.constant 0 : index
    %18 = vector.load %arg6[%c0_12, %c0_13] : memref<16x8xbf16, #tpu.memory_space<vmem>>, vector<16x8xbf16>
    %cst_14 = arith.constant dense<0.000000e+00> : vector<16x8xf32>
    %19 = tpu.matmul %17, %18, %cst_14 {dimension_numbers = #tpu.dot_dimension_numbers<[1], [0], [0], [1], [0, 0, 1, 1], [], []>} : vector<16x16xbf16>, vector<16x8xbf16>, vector<16x8xf32> -> vector<16x8xf32>
    %c0_15 = arith.constant 0 : index
    %c0_16 = arith.constant 0 : index
    %20 = vector.load %arg7[%c0_15, %c0_16] : memref<1x8xf32, #tpu.memory_space<vmem>>, vector<1x8xf32>
    %21 = vector.broadcast %20 : vector<1x8xf32> to vector<16x8xf32>
    %22 = arith.addf %19, %21 : vector<16x8xf32>
    %c0_17 = arith.constant 0 : index
    %c0_18 = arith.constant 0 : index
    %23 = vector.load %arg8[%c0_17, %c0_18] : memref<16x8xf32, #tpu.memory_space<vmem>>, vector<16x8xf32>
    tpu.vector_store %arg8[%c0_17, %c0_18], %22 {strides = array<i32>} : memref<16x8xf32, #tpu.memory_space<vmem>>, vector<16x8xf32>,
    return
  }
  func.func @transform_0(%arg0: i32) -> (i32, i32) {
    %c0_i32 = arith.constant 0 : i32
    %c0_i32_0 = arith.constant 0 : i32
    return %arg0, %c0_i32 : i32, i32
  }
  func.func @transform_1(%arg0: i32) -> (i32, i32) {
    %c0_i32 = arith.constant 0 : i32
    %c0_i32_0 = arith.constant 0 : i32
    %c0_i32_1 = arith.constant 0 : i32
    return %c0_i32, %c0_i32_0 : i32, i32
  }
  func.func @transform_2(%arg0: i32) -> (i32, i32) {
    %c0_i32 = arith.constant 0 : i32
    %c0_i32_0 = arith.constant 0 : i32
    %c0_i32_1 = arith.constant 0 : i32
    return %c0_i32, %c0_i32_0 : i32, i32
  }
  func.func @transform_3(%arg0: i32) -> (i32, i32) {
    %c0_i32 = arith.constant 0 : i32
    %c0_i32_0 = arith.constant 0 : i32
    %c0_i32_1 = arith.constant 0 : i32
    return %c0_i32, %c0_i32_0 : i32, i32
  }
  func.func @transform_4(%arg0: i32) -> (i32, i32) {
    %c0_i32 = arith.constant 0 : i32
    %c0_i32_0 = arith.constant 0 : i32
    %c0_i32_1 = arith.constant 0 : i32
    return %c0_i32, %c0_i32_0 : i32, i32
  }
  func.func @transform_5(%arg0: i32) -> (i32, i32) {
    %c0_i32 = arith.constant 0 : i32
    %c0_i32_0 = arith.constant 0 : i32
    %c0_i32_1 = arith.constant 0 : i32
    return %c0_i32, %c0_i32_0 : i32, i32
  }
  func.func @transform_6(%arg0: i32) -> (i32, i32) {
    %c0_i32 = arith.constant 0 : i32
    %c0_i32_0 = arith.constant 0 : i32
    %c0_i32_1 = arith.constant 0 : i32
    return %c0_i32, %c0_i32_0 : i32, i32
  }
  func.func @transform_7(%arg0: i32) -> (i32, i32) {
    %c0_i32 = arith.constant 0 : i32
    %c0_i32_0 = arith.constant 0 : i32
    return %arg0, %c0_i32 : i32, i32
  }
}

</mosaic_0001>

<llo_original>
// kernel: _net_forward_jit.1
$region0: #{_net_forward_jit.1}
  #allocation0 [shape = 'u32[]', space=smem, size = 0x4, offset = 0x4, fixed_abs, tag = 'smem constant byte address 0x4 - core index']
  #allocation1 [shape = 'u32[144,128]{1,0:T(1,128)}', space=vmem, size = 0x12000, scoped, tag = 'internal scratch']
  %s0 = inlined_call_operand.vmem [shape: f32[16,8], index: 0, kind: input, shape index: {}]
  %s1 = inlined_call_operand.vmem [shape: bf16[8,128], index: 1, kind: input, shape index: {}]
  %s2 = inlined_call_operand.vmem [shape: f32[1,128], index: 2, kind: input, shape index: {}]
  %s3 = inlined_call_operand.vmem [shape: bf16[128,16], index: 3, kind: input, shape index: {}]
  %s4 = inlined_call_operand.vmem [shape: f32[1,16], index: 4, kind: input, shape index: {}]
  %s5 = inlined_call_operand.vmem [shape: bf16[16,8], index: 5, kind: input, shape index: {}]
  %s6 = inlined_call_operand.vmem [shape: f32[1,8], index: 6, kind: input, shape index: {}]
  %s7 = inlined_call_operand.vmem [shape: f32[16,8], index: 7, kind: output, shape index: {}]
  %s8 = sld [smem:[#allocation0]]
  $region38: #{_net_forward_jit.1} parent=0
    _
  %s10 = ssub.s32 1, %s8
  %s11 = scalar_select 0, %s10, %s8
  // Predicated region
  $region2: #{_net_forward_jit.1} parent=0 // pred_check
    _
  $region3: #{_net_forward_jit.1} parent=0 // pred_check_branch
    %13 = sbr.rel (0) target = $region5
  $region4: #{_net_forward_jit.1} parent=0 // pred_region
    _
  $region5: #{_net_forward_jit.1} parent=0 // pred_fallthru
    _
  // Predicated region
  $region6: #{_net_forward_jit.1} parent=0 // pred_check
    _
  $region7: #{_net_forward_jit.1} parent=0 // pred_check_branch
    %15 = sbr.rel (0) target = $region9
  $region8: #{_net_forward_jit.1} parent=0 // pred_region
    _
  $region9: #{_net_forward_jit.1} parent=0 // pred_fallthru
    _
  // Predicated region
  $region10: #{_net_forward_jit.1} parent=0 // pred_check
    _
  $region11: #{_net_forward_jit.1} parent=0 // pred_check_branch
    %17 = sbr.rel (0) target = $region13
  $region12: #{_net_forward_jit.1} parent=0 // pred_region
    _
  $region13: #{_net_forward_jit.1} parent=0 // pred_fallthru
    _
  // Predicated region
  $region14: #{_net_forward_jit.1} parent=0 // pred_check
    _
  $region15: #{_net_forward_jit.1} parent=0 // pred_check_branch
    %19 = sbr.rel (0) target = $region17
  $region16: #{_net_forward_jit.1} parent=0 // pred_region
    _
  $region17: #{_net_forward_jit.1} parent=0 // pred_fallthru
    _
  // Predicated region
  $region18: #{_net_forward_jit.1} parent=0 // pred_check
    _
  $region19: #{_net_forward_jit.1} parent=0 // pred_check_branch
    %21 = sbr.rel (0) target = $region21
  $region20: #{_net_forward_jit.1} parent=0 // pred_region
    _
  $region21: #{_net_forward_jit.1} parent=0 // pred_fallthru
    _
  // Predicated region
  $region22: #{_net_forward_jit.1} parent=0 // pred_check
    _
  $region23: #{_net_forward_jit.1} parent=0 // pred_check_branch
    %23 = sbr.rel (0) target = $region25
  $region24: #{_net_forward_jit.1} parent=0 // pred_region
    _
  $region25: #{_net_forward_jit.1} parent=0 // pred_fallthru
    _
  // Predicated region
  $region26: #{_net_forward_jit.1} parent=0 // pred_check
    _
  $region27: #{_net_forward_jit.1} parent=0 // pred_check_branch
    %25 = sbr.rel (0) target = $region29
  $region28: #{_net_forward_jit.1} parent=0 // pred_region
    _
  $region29: #{_net_forward_jit.1} parent=0 // pred_fallthru
    _
  %v27 = vld [vmem:[%s0] sm:$0xff]
  %v28 = vld [vmem:[%s0 + $0x8] sm:$0xff]
  %v29 = vpack.c.bf16 %v28, %v27
  %v30 = vld [vmem:[%s1] sm:$0xf]
  %v31 = vld [vmem:[%s2] sm:$0x1]
  %v33 = vlaneseq
  %v34 = vshrl.u32 %v33, 7
  %v35 = vsub.s32 0, %v34
  %v36 = vrot.slane %v31, %v35
  %vm38 = vcmask 64512
  %v40 = vsel %vm38, %v29, 0
  %vm42 = vcmask 1043456
  %v44 = vsel %vm42, %v30, 0
  %46 = vmatprep.subr.bf16.mxu0 0
  %47 = vmatpush1.bf16.msra.mxu0 %v44
  %48 = vmatprep.subr.bf16.mxu0 0
  %49 = vmatpush1.bf16.msra.mxu0 0
  %50 = vmatprep.subr.bf16.mxu0 0
  %51 = vmatpush1.bf16.msra.mxu0 0
  %52 = vmatprep.subr.bf16.mxu0 0
  %53 = vmatpush1.bf16.msra.mxu0 0
  %54 = vmatprep.subr.bf16.mxu0 0
  %55 = vmatpush1.bf16.msra.mxu0 0
  %56 = vmatprep.subr.bf16.mxu0 0
  %57 = vmatpush1.bf16.msra.mxu0 0
  %58 = vmatprep.subr.bf16.mxu0 0
  %59 = vmatpush1.bf16.msra.mxu0 0
  %60 = vmatprep.subr.bf16.mxu0 0
  %61 = vmatpush1.bf16.msra.mxu0 0
  %62 = vmatprep.subr.bf16.mxu0 0
  %63 = vmatpush1.bf16.msra.mxu0 0
  %64 = vmatprep.subr.bf16.mxu0 0
  %65 = vmatpush1.bf16.msra.mxu0 0
  %66 = vmatprep.subr.bf16.mxu0 0
  %67 = vmatpush1.bf16.msra.mxu0 0
  %68 = vmatprep.subr.bf16.mxu0 0
  %69 = vmatpush1.bf16.msra.mxu0 0
  %70 = vmatprep.subr.bf16.mxu0 0
  %71 = vmatpush1.bf16.msra.mxu0 0
  %72 = vmatprep.subr.bf16.mxu0 0
  %73 = vmatpush1.bf16.msra.mxu0 0
  %74 = vmatprep.subr.bf16.mxu0 0
  %75 = vmatpush1.bf16.msra.mxu0 0
  %76 = vmatprep.subr.bf16.mxu0 0
  %77 = vmatpush1.bf16.msra.mxu0 0
  %78 = vmatprep.mubr.bf16.mxu0 0
  %79 = vmatmul.mubr.bf16.gmra.mrb[0].mxu0 %v40
  %v80 = vpop.f32.mrb[0].mxu0
  %v81 = vadd.f32 %v36, %v80
  %v82 = vpop.f32.mrb[0].mxu0
  %v83 = vpop.f32.mrb[0].mxu0
  %v84 = vadd.f32 %v36, %v83
  %v85 = vpop.f32.mrb[0].mxu0
  %86 = vdwg.mxu0
  %v87 = vmax.f32 %v81, 0.0
  %v88 = vmax.f32 %v84, 0.0
  %v89 = vpack.c.bf16 %v88, %v87
  %v90 = vld [vmem:[%s3] sm:$0xf]
  %v91 = vld [vmem:[%s3 + $0x4] sm:$0xf]
  %v92 = vld [vmem:[%s3 + $0x8] sm:$0xf]
  %v93 = vld [vmem:[%s3 + $0xc] sm:$0xf]
  %v94 = vld [vmem:[%s3 + $0x10] sm:$0xf]
  %v95 = vld [vmem:[%s3 + $0x14] sm:$0xf]
  %v96 = vld [vmem:[%s3 + $0x18] sm:$0xf]
  %v97 = vld [vmem:[%s3 + $0x1c] sm:$0xf]
  %v98 = vld [vmem:[%s3 + $0x20] sm:$0xf]
  %v99 = vld [vmem:[%s3 + $0x24] sm:$0xf]
  %v100 = vld [vmem:[%s3 + $0x28] sm:$0xf]
  %v101 = vld [vmem:[%s3 + $0x2c] sm:$0xf]
  %v102 = vld [vmem:[%s3 + $0x30] sm:$0xf]
  %v103 = vld [vmem:[%s3 + $0x34] sm:$0xf]
  %v104 = vld [vmem:[%s3 + $0x38] sm:$0xf]
  %v105 = vld [vmem:[%s3 + $0x3c] sm:$0xf]
  %v106 = vld [vmem:[%s4] sm:$0x1]
  %v108 = vlaneseq
  %v109 = vshrl.u32 %v108, 7
  %v110 = vsub.s32 0, %v109
  %v111 = vrot.slane %v106, %v110
  %v129 = vunpack.c.l.b16 %v90
  %v130 = vunpack.c.l.b16 %v91
  %v131 = vunpack.c.l.b16 %v92
  %v132 = vunpack.c.l.b16 %v93
  %v133 = vunpack.c.l.b16 %v94
  %v134 = vunpack.c.l.b16 %v95
  %v135 = vunpack.c.l.b16 %v96
  %v136 = vunpack.c.l.b16 %v97
  %v137 = vunpack.c.l.b16 %v98
  %v138 = vunpack.c.l.b16 %v99
  %v139 = vunpack.c.l.b16 %v100
  %v140 = vunpack.c.l.b16 %v101
  %v141 = vunpack.c.l.b16 %v102
  %v142 = vunpack.c.l.b16 %v103
  %v143 = vunpack.c.l.b16 %v104
  %v144 = vunpack.c.l.b16 %v105
  %v145 = vpack.c.b16 %v130, %v129
  %v146 = vpack.c.b16 %v132, %v131
  %v147 = vpack.c.b16 %v134, %v133
  %v148 = vpack.c.b16 %v136, %v135
  %v149 = vpack.c.b16 %v138, %v137
  %v150 = vpack.c.b16 %v140, %v139
  %v151 = vpack.c.b16 %v142, %v141
  %v152 = vpack.c.b16 %v144, %v143
  %161 = vmatprep.subr.bf16.mxu0 0
  %162 = vmatpush1.bf16.msra.mxu0 %v145
  %163 = vmatprep.subr.bf16.mxu0 0
  %164 = vmatpush1.bf16.msra.mxu0 %v146
  %165 = vmatprep.subr.bf16.mxu0 0
  %166 = vmatpush1.bf16.msra.mxu0 %v147
  %167 = vmatprep.subr.bf16.mxu0 0
  %168 = vmatpush1.bf16.msra.mxu0 %v148
  %169 = vmatprep.subr.bf16.mxu0 0
  %170 = vmatpush1.bf16.msra.mxu0 %v149
  %171 = vmatprep.subr.bf16.mxu0 0
  %172 = vmatpush1.bf16.msra.mxu0 %v150
  %173 = vmatprep.subr.bf16.mxu0 0
  %174 = vmatpush1.bf16.msra.mxu0 %v151
  %175 = vmatprep.subr.bf16.mxu0 0
  %176 = vmatpush1.bf16.msra.mxu0 %v152
  %177 = vmatprep.subr.bf16.mxu0 0
  %178 = vmatpush1.bf16.msra.mxu0 0
  %179 = vmatprep.subr.bf16.mxu0 0
  %180 = vmatpush1.bf16.msra.mxu0 0
  %181 = vmatprep.subr.bf16.mxu0 0
  %182 = vmatpush1.bf16.msra.mxu0 0
  %183 = vmatprep.subr.bf16.mxu0 0
  %184 = vmatpush1.bf16.msra.mxu0 0
  %185 = vmatprep.subr.bf16.mxu0 0
  %186 = vmatpush1.bf16.msra.mxu0 0
  %187 = vmatprep.subr.bf16.mxu0 0
  %188 = vmatpush1.bf16.msra.mxu0 0
  %189 = vmatprep.subr.bf16.mxu0 0
  %190 = vmatpush1.bf16.msra.mxu0 0
  %191 = vmatprep.subr.bf16.mxu0 0
  %192 = vmatpush1.bf16.msra.mxu0 0
  %193 = vmatprep.mubr.bf16.mxu0 0
  %194 = vmatmul.mubr.bf16.gmra.mrb[0].mxu0 %v89
  %v195 = vpop.f32.mrb[0].mxu0
  %v196 = vadd.f32 %v111, %v195
  %v197 = vpop.f32.mrb[0].mxu0
  %v198 = vpop.f32.mrb[0].mxu0
  %v199 = vadd.f32 %v111, %v198
  %v200 = vpop.f32.mrb[0].mxu0
  %201 = vdwg.mxu0
  %v202 = vmax.f32 %v196, 0.0
  %v203 = vmax.f32 %v199, 0.0
  %v204 = vpack.c.bf16 %v203, %v202
  %v205 = vld [vmem:[%s5] sm:$0xf]
  %v206 = vld [vmem:[%s5 + $0x4] sm:$0xf]
  %v207 = vld [vmem:[%s6] sm:$0x1]
  %v209 = vlaneseq
  %v210 = vshrl.u32 %v209, 7
  %v211 = vsub.s32 0, %v210
  %v212 = vrot.slane %v207, %v211
  %v216 = vunpack.c.l.b16 %v205
  %v217 = vunpack.c.l.b16 %v206
  %v218 = vpack.c.b16 %v217, %v216
  %vm220 = vcmask 130048
  %v222 = vsel %vm220, %v204, 0
  %224 = vmatprep.subr.bf16.mxu0 0
  %225 = vmatpush1.bf16.msra.mxu0 %v218
  %226 = vmatprep.subr.bf16.mxu0 0
  %227 = vmatpush1.bf16.msra.mxu0 0
  %228 = vmatprep.subr.bf16.mxu0 0
  %229 = vmatpush1.bf16.msra.mxu0 0
  %230 = vmatprep.subr.bf16.mxu0 0
  %231 = vmatpush1.bf16.msra.mxu0 0
  %232 = vmatprep.subr.bf16.mxu0 0
  %233 = vmatpush1.bf16.msra.mxu0 0
  %234 = vmatprep.subr.bf16.mxu0 0
  %235 = vmatpush1.bf16.msra.mxu0 0
  %236 = vmatprep.subr.bf16.mxu0 0
  %237 = vmatpush1.bf16.msra.mxu0 0
  %238 = vmatprep.subr.bf16.mxu0 0
  %239 = vmatpush1.bf16.msra.mxu0 0
  %240 = vmatprep.subr.bf16.mxu0 0
  %241 = vmatpush1.bf16.msra.mxu0 0
  %242 = vmatprep.subr.bf16.mxu0 0
  %243 = vmatpush1.bf16.msra.mxu0 0
  %244 = vmatprep.subr.bf16.mxu0 0
  %245 = vmatpush1.bf16.msra.mxu0 0
  %246 = vmatprep.subr.bf16.mxu0 0
  %247 = vmatpush1.bf16.msra.mxu0 0
  %248 = vmatprep.subr.bf16.mxu0 0
  %249 = vmatpush1.bf16.msra.mxu0 0
  %250 = vmatprep.subr.bf16.mxu0 0
  %251 = vmatpush1.bf16.msra.mxu0 0
  %252 = vmatprep.subr.bf16.mxu0 0
  %253 = vmatpush1.bf16.msra.mxu0 0
  %254 = vmatprep.subr.bf16.mxu0 0
  %255 = vmatpush1.bf16.msra.mxu0 0
  %256 = vmatprep.mubr.bf16.mxu0 0
  %257 = vmatmul.mubr.bf16.gmra.mrb[0].mxu0 %v222
  %v258 = vpop.f32.mrb[0].mxu0
  %v259 = vadd.f32 %v212, %v258
  %v260 = vpop.f32.mrb[0].mxu0
  %v261 = vpop.f32.mrb[0].mxu0
  %v262 = vadd.f32 %v212, %v261
  %v263 = vpop.f32.mrb[0].mxu0
  %264 = vdwg.mxu0
  %265 = vst.msk [vmem:[%s7] sm:$0xff] %vm38, %v259
  %266 = vst.msk [vmem:[%s7 + $0x8] sm:$0xff] %vm38, %v262
  // Predicated region
  $region30: #{_net_forward_jit.1} parent=0 // pred_check
    _
  $region31: #{_net_forward_jit.1} parent=0 // pred_check_branch
    %268 = sbr.rel (0) target = $region33
  $region32: #{_net_forward_jit.1} parent=0 // pred_region
    _
  $region33: #{_net_forward_jit.1} parent=0 // pred_fallthru
    _
  // Predicated region
  $region34: #{_net_forward_jit.1} parent=0 // pred_check
    _
  $region35: #{_net_forward_jit.1} parent=0 // pred_check_branch
    %270 = sbr.rel (0) target = $region37
  $region36: #{_net_forward_jit.1} parent=0 // pred_region
    _
  $region37: #{_net_forward_jit.1} parent=0 // pred_fallthru
    _

</llo_original>
